<compile_context>
chip_gen: v6e
topology: v6e:2x2x1
jax: 0.10.0
libtpu: 0.0.40
codegen_flags: <defaults>
</compile_context>

<pallas_src>
import functools

import jax
import jax.numpy as jnp
from jax.experimental import pallas as pl
from jax.experimental.pallas import tpu as pltpu

_LANES = 128            # vreg lane width (same on v5e/v6e/v7x)
_ROW_BLOCK = 512        # rows per tile in the large-input path (~85% HBM roofline)


def _relu_kernel(x_ref, o_ref):
    o_ref[...] = jnp.maximum(x_ref[...], jnp.zeros((), x_ref.dtype))


def _sublane_tile(dtype) -> int:
    # f32 -> 8, bf16 -> 16, int8/fp8 -> 32 (sub-32-bit dtypes pack along sublanes).
    itemsize = jnp.dtype(dtype).itemsize
    return max(8, 32 // max(itemsize, 1))


def _round_up(n: int, m: int) -> int:
    return ((n + m - 1) // m) * m


@functools.lru_cache(maxsize=1)
def _vmem_budget_bytes() -> int:
    # Whole-array fast-path budget, derived from the chip's actual VMEM when
    # possible (v7x: 64 MiB physical / 32 MiB default scoped), with a
    # conservative fallback.  Cap at 16 MiB so in+out always fit comfortably
    # under every generation's default scoped VMEM limit.
    try:
        cap = int(pltpu.get_tpu_info().vmem_capacity_bytes)
    except Exception:
        cap = 64 * 1024 * 1024
    return min(cap // 4, 16 * 1024 * 1024)


def relu_pallas(x, *, donate: bool = False):
    """Elementwise ReLU via Pallas using a lane-dense (rows, 128) view.

    donate=True aliases the kernel input to its output (torch inplace=True
    semantics); only enable when the immediate input buffer is donatable
    (e.g. an intermediate under jit).
    """
    total = x.size
    if total == 0:
        return x

    dtype = x.dtype
    itemsize = jnp.dtype(dtype).itemsize
    sub = _sublane_tile(dtype)

    # ---- Lane-dense view: collapse everything into (rows, 128). ----
    pad = (-total) % _LANES
    flat = x.reshape(-1)
    if pad:
        # TODO(synk): for sizes not divisible by 128 we pad the flat view; the
        # small pad copy is still far cheaper than a lane-sparse block.
        flat = jnp.pad(flat, (0, pad))
    rows = flat.size // _LANES
    x2d = flat.reshape(rows, _LANES)

    alias = {0: 0} if donate else {}

    padded_rows = _round_up(rows, sub)
    footprint = 2 * padded_rows * _LANES * itemsize  # in + out, tile-padded

    if footprint <= _vmem_budget_bytes():
        # Whole-array VMEM block: no grid bookkeeping, dense unmasked vld/vst.
        y2d = pl.pallas_call(
            _relu_kernel,
            out_shape=jax.ShapeDtypeStruct(x2d.shape, dtype),
            in_specs=[pl.BlockSpec(memory_space=pltpu.MemorySpace.VMEM)],
            out_specs=pl.BlockSpec(memory_space=pltpu.MemorySpace.VMEM),
            input_output_aliases=alias,
        )(x2d)
    else:
        # Tiled (rows, 128) path: lane-dense 512x128 blocks, auto double-
        # buffered, parallel grid (megacore-shardable on v7x).
        blk = min(_ROW_BLOCK, padded_rows)
        spec = pl.BlockSpec((blk, _LANES), lambda i: (i, 0))
        y2d = pl.pallas_call(
            _relu_kernel,
            out_shape=jax.ShapeDtypeStruct(x2d.shape, dtype),
            grid=(pl.cdiv(rows, blk),),
            in_specs=[spec],
            out_specs=spec,
            input_output_aliases=alias,
            compiler_params=pltpu.CompilerParams(
                dimension_semantics=("parallel",),
            ),
        )(x2d)

    y = y2d.reshape(-1)
    if pad:
        y = y[:total]
    return y.reshape(x.shape)


class M:
    """JAX/Pallas equivalent of the PyTorch module M (ReLU)."""

    def __call__(self, x139):
        return relu_pallas(x139)


if __name__ == "__main__":
    key = jax.random.PRNGKey(0)
    # Shape implied by the module's forward: [1, 192, 12, 12] float32 (NCHW).
    x139 = jax.random.normal(key, (1, 192, 12, 12), dtype=jnp.float32)

    ref = jnp.maximum(x139, 0.0)

    m = M()
    x140 = jax.block_until_ready(m(x139))

    assert x140.shape == (1, 192, 12, 12)
    assert x140.dtype == jnp.float32
    assert bool(jnp.allclose(x140, ref))

    print("KERNEL_OK")
</pallas_src>

<mosaic_0001>
module attributes {stable_mosaic.version = 11 : i64} {
  func.func @_relu_kernel(%arg0: memref<216x128xf32, #tpu.memory_space<vmem>>, %arg1: memref<216x128xf32, #tpu.memory_space<vmem>>) attributes {dimension_semantics = [], scalar_prefetch = 0 : i64, scratch_operands = 0 : i64, tpu.core_type = #tpu.core_type<tc>} {
    %c0 = arith.constant 0 : index
    %c0_0 = arith.constant 0 : index
    %0 = vector.load %arg0[%c0, %c0_0] : memref<216x128xf32, #tpu.memory_space<vmem>>, vector<216x128xf32>
    %cst = arith.constant 0.000000e+00 : f32
    %1 = vector.broadcast %cst : f32 to vector<216x128xf32>
    %2 = arith.maximumf %0, %1 : vector<216x128xf32>
    %c0_1 = arith.constant 0 : index
    %c0_2 = arith.constant 0 : index
    %3 = vector.load %arg1[%c0_1, %c0_2] : memref<216x128xf32, #tpu.memory_space<vmem>>, vector<216x128xf32>
    tpu.vector_store %arg1[%c0_1, %c0_2], %2 {strides = array<i32>} : memref<216x128xf32, #tpu.memory_space<vmem>>, vector<216x128xf32>,
    return
  }
}

</mosaic_0001>

<llo_original>
// kernel: tpu_custom_call.1
$region0: #{tpu_custom_call.1}
  #allocation0 [shape = 'u32[]', space=smem, size = 0x4, offset = 0x4, fixed_abs, tag = 'smem constant byte address 0x4 - core index']
  #allocation1 [shape = 'u32[144,128]{1,0:T(1,128)}', space=vmem, size = 0x12000, scoped, tag = 'internal scratch']
  %s0 = inlined_call_operand.hbm [shape: f32[216,128], index: 0, kind: input, shape index: {}]
  %s1 = inlined_call_operand.hbm [shape: f32[216,128], index: 1, kind: output, shape index: {}]
  %s2 = sld [smem:[#allocation0]]
  $region18: #{tpu_custom_call.1} parent=0
    _
  %s4 = ssub.s32 1, %s2
  %s5 = scalar_select 0, %s4, %s2
  $region1: #{tpu_custom_call.1} parent=0
    #allocation2 [shape = 'u8[110592]{0}', space=vmem, size = 0x1b000, scoped, tag = 'input window, operand 0, single buffered']
    #allocation3 [shape = 's32[1]{0}', space=sflag, size = 0x4, scoped, tag = 'scoped memory for tpu_custom_call.1']
    #allocation4 [shape = 's32[1]{0}', space=sflag, size = 0x4, scoped, tag = 'scoped memory for tpu_custom_call.1']
    #allocation5 [shape = 'u8[110592]{0}', space=vmem, size = 0x1b000, scoped, tag = 'output window, operand 0, single buffered']
    %6 = vsyncpa [#allocation3], 0
    %7 = vsyncpa [#allocation4], 0
    // Predicated region
    $region2: #{tpu_custom_call.1} parent=1 // pred_check
      _
    $region3: #{tpu_custom_call.1} parent=1 // pred_check_branch
      %9 = sbr.rel (0) target = $region5
    $region4: #{tpu_custom_call.1} parent=1 // pred_region
      %s11 = ssub.s32 3456, 3456
      %12 = vsyncadd [#allocation3], %s11
      %s13 = sshll.u32 [#allocation2], 4
      %s14 = int_to_ptr.vmem [resolvable:$true] %s13
      %19 = dma.hbm_to_vmem [thread:$0]  %s0, 3456, %s14, [#allocation3], 128, 128, 8
    $region5: #{tpu_custom_call.1} parent=1 // pred_fallthru
      _
    // Predicated region
    $region6: #{tpu_custom_call.1} parent=1 // pred_check
      _
    $region7: #{tpu_custom_call.1} parent=1 // pred_check_branch
      %21 = sbr.rel (0) target = $region9
    $region8: #{tpu_custom_call.1} parent=1 // pred_region
      %22 = dma.done [#allocation3], 3456
    $region9: #{tpu_custom_call.1} parent=1 // pred_fallthru
      _
    %v23 = vld [vmem:[#allocation2] sm:$0xff]
    %v24 = vld [vmem:[#allocation2 + $0x8] sm:$0xff]
    %v25 = vld [vmem:[#allocation2 + $0x10] sm:$0xff]
    %v26 = vld [vmem:[#allocation2 + $0x18] sm:$0xff]
    %v27 = vld [vmem:[#allocation2 + $0x20] sm:$0xff]
    %v28 = vld [vmem:[#allocation2 + $0x28] sm:$0xff]
    %v29 = vld [vmem:[#allocation2 + $0x30] sm:$0xff]
    %v30 = vld [vmem:[#allocation2 + $0x38] sm:$0xff]
    %v31 = vld [vmem:[#allocation2 + $0x40] sm:$0xff]
    %v32 = vld [vmem:[#allocation2 + $0x48] sm:$0xff]
    %v33 = vld [vmem:[#allocation2 + $0x50] sm:$0xff]
    %v34 = vld [vmem:[#allocation2 + $0x58] sm:$0xff]
    %v35 = vld [vmem:[#allocation2 + $0x60] sm:$0xff]
    %v36 = vld [vmem:[#allocation2 + $0x68] sm:$0xff]
    %v37 = vld [vmem:[#allocation2 + $0x70] sm:$0xff]
    %v38 = vld [vmem:[#allocation2 + $0x78] sm:$0xff]
    %v39 = vld [vmem:[#allocation2 + $0x80] sm:$0xff]
    %v40 = vld [vmem:[#allocation2 + $0x88] sm:$0xff]
    %v41 = vld [vmem:[#allocation2 + $0x90] sm:$0xff]
    %v42 = vld [vmem:[#allocation2 + $0x98] sm:$0xff]
    %v43 = vld [vmem:[#allocation2 + $0xa0] sm:$0xff]
    %v44 = vld [vmem:[#allocation2 + $0xa8] sm:$0xff]
    %v45 = vld [vmem:[#allocation2 + $0xb0] sm:$0xff]
    %v46 = vld [vmem:[#allocation2 + $0xb8] sm:$0xff]
    %v47 = vld [vmem:[#allocation2 + $0xc0] sm:$0xff]
    %v48 = vld [vmem:[#allocation2 + $0xc8] sm:$0xff]
    %v49 = vld [vmem:[#allocation2 + $0xd0] sm:$0xff]
    %v50 = vmax.f32 %v23, 0.0
    %v51 = vmax.f32 %v24, 0.0
    %v52 = vmax.f32 %v25, 0.0
    %v53 = vmax.f32 %v26, 0.0
    %v54 = vmax.f32 %v27, 0.0
    %v55 = vmax.f32 %v28, 0.0
    %v56 = vmax.f32 %v29, 0.0
    %v57 = vmax.f32 %v30, 0.0
    %v58 = vmax.f32 %v31, 0.0
    %v59 = vmax.f32 %v32, 0.0
    %v60 = vmax.f32 %v33, 0.0
    %v61 = vmax.f32 %v34, 0.0
    %v62 = vmax.f32 %v35, 0.0
    %v63 = vmax.f32 %v36, 0.0
    %v64 = vmax.f32 %v37, 0.0
    %v65 = vmax.f32 %v38, 0.0
    %v66 = vmax.f32 %v39, 0.0
    %v67 = vmax.f32 %v40, 0.0
    %v68 = vmax.f32 %v41, 0.0
    %v69 = vmax.f32 %v42, 0.0
    %v70 = vmax.f32 %v43, 0.0
    %v71 = vmax.f32 %v44, 0.0
    %v72 = vmax.f32 %v45, 0.0
    %v73 = vmax.f32 %v46, 0.0
    %v74 = vmax.f32 %v47, 0.0
    %v75 = vmax.f32 %v48, 0.0
    %v76 = vmax.f32 %v49, 0.0
    %77 = vst [vmem:[#allocation5] sm:$0xff] %v50
    %78 = vst [vmem:[#allocation5 + $0x8] sm:$0xff] %v51
    %79 = vst [vmem:[#allocation5 + $0x10] sm:$0xff] %v52
    %80 = vst [vmem:[#allocation5 + $0x18] sm:$0xff] %v53
    %81 = vst [vmem:[#allocation5 + $0x20] sm:$0xff] %v54
    %82 = vst [vmem:[#allocation5 + $0x28] sm:$0xff] %v55
    %83 = vst [vmem:[#allocation5 + $0x30] sm:$0xff] %v56
    %84 = vst [vmem:[#allocation5 + $0x38] sm:$0xff] %v57
    %85 = vst [vmem:[#allocation5 + $0x40] sm:$0xff] %v58
    %86 = vst [vmem:[#allocation5 + $0x48] sm:$0xff] %v59
    %87 = vst [vmem:[#allocation5 + $0x50] sm:$0xff] %v60
    %88 = vst [vmem:[#allocation5 + $0x58] sm:$0xff] %v61
    %89 = vst [vmem:[#allocation5 + $0x60] sm:$0xff] %v62
    %90 = vst [vmem:[#allocation5 + $0x68] sm:$0xff] %v63
    %91 = vst [vmem:[#allocation5 + $0x70] sm:$0xff] %v64
    %92 = vst [vmem:[#allocation5 + $0x78] sm:$0xff] %v65
    %93 = vst [vmem:[#allocation5 + $0x80] sm:$0xff] %v66
    %94 = vst [vmem:[#allocation5 + $0x88] sm:$0xff] %v67
    %95 = vst [vmem:[#allocation5 + $0x90] sm:$0xff] %v68
    %96 = vst [vmem:[#allocation5 + $0x98] sm:$0xff] %v69
    %97 = vst [vmem:[#allocation5 + $0xa0] sm:$0xff] %v70
    %98 = vst [vmem:[#allocation5 + $0xa8] sm:$0xff] %v71
    %99 = vst [vmem:[#allocation5 + $0xb0] sm:$0xff] %v72
    %100 = vst [vmem:[#allocation5 + $0xb8] sm:$0xff] %v73
    %101 = vst [vmem:[#allocation5 + $0xc0] sm:$0xff] %v74
    %102 = vst [vmem:[#allocation5 + $0xc8] sm:$0xff] %v75
    %103 = vst [vmem:[#allocation5 + $0xd0] sm:$0xff] %v76
    // Predicated region
    $region10: #{tpu_custom_call.1} parent=1 // pred_check
      _
    $region11: #{tpu_custom_call.1} parent=1 // pred_check_branch
      %105 = sbr.rel (0) target = $region13
    $region12: #{tpu_custom_call.1} parent=1 // pred_region
      %s107 = ssub.s32 3456, 3456
      %108 = vsyncadd [#allocation4], %s107
      %s109 = sshll.u32 [#allocation5], 4
      %s110 = int_to_ptr.vmem [resolvable:$true] %s109
      %115 = dma.vmem_to_hbm [thread:$0]  %s110, 3456, %s1, [#allocation4], 128, 128, 8
    $region13: #{tpu_custom_call.1} parent=1 // pred_fallthru
      _
    // Predicated region
    $region14: #{tpu_custom_call.1} parent=1 // pred_check
      _
    $region15: #{tpu_custom_call.1} parent=1 // pred_check_branch
      %117 = sbr.rel (0) target = $region17
    $region16: #{tpu_custom_call.1} parent=1 // pred_region
      %118 = dma.done [#allocation4], 3456
    $region17: #{tpu_custom_call.1} parent=1 // pred_fallthru
      _
    %119 = vsyncpa [#allocation3], 1
    %120 = vsyncpa [#allocation4], 1

</llo_original>
